<compile_context>
chip_gen: v6e
topology: v6e:2x2x1
jax: 0.10.0
libtpu: 0.0.40
codegen_flags: <defaults>
</compile_context>

<pallas_src>
import math

import jax
import jax.numpy as jnp
from jax.experimental import pallas as pl
from jax.experimental.pallas import tpu as pltpu


def _round_up(n, m):
    return ((n + m - 1) // m) * m


def _logistic_kernel(x_ref, w_ref, b_ref, o_ref):
    # x_ref: (TB, D) bf16, w_ref: (D, CP) bf16, b_ref: (1, CP) f32,
    # o_ref: (TB, CP) f32.  MXU matmul with f32 accumulation; bias add in f32.
    y = jnp.dot(x_ref[...], w_ref[...], preferred_element_type=jnp.float32)
    o_ref[...] = y + b_ref[...]


def mnist_logistic_forward(x, weights, bias, *, tile_b=512):
    """x: (B, 784) f32, weights: (784, 10) f32, bias: (10,) f32 -> (B, 10) f32."""
    B, D = x.shape
    Dw, C = weights.shape
    assert Dw == D

    # Lane-dense class dimension: pad C up to a multiple of 128.
    CP = _round_up(C, 128)
    w_p = jnp.zeros((D, CP), jnp.bfloat16).at[:, :C].set(
        weights.astype(jnp.bfloat16))
    b_p = jnp.zeros((1, CP), jnp.float32).at[:, :C].set(
        bias.astype(jnp.float32))

    # Batch tile: big tiles for pipelining, but never larger than the
    # (sublane-rounded) batch itself.
    TB = tile_b if B >= tile_b else _round_up(B, 8)
    BP = _round_up(B, TB)

    x_p = x.astype(jnp.bfloat16)
    if BP != B:
        x_p = jnp.pad(x_p, ((0, BP - B), (0, 0)))

    grid = (BP // TB,)

    out_padded = pl.pallas_call(
        _logistic_kernel,
        out_shape=jax.ShapeDtypeStruct((BP, CP), jnp.float32),
        grid=grid,
        in_specs=[
            pl.BlockSpec((TB, D), lambda i: (i, 0)),   # x: tiled over batch
            pl.BlockSpec((D, CP), lambda i: (0, 0)),   # W: resident
            pl.BlockSpec((1, CP), lambda i: (0, 0)),   # b: resident
        ],
        out_specs=pl.BlockSpec((TB, CP), lambda i: (i, 0)),
        compiler_params=pltpu.CompilerParams(
            dimension_semantics=("parallel",)),
    )(x_p, w_p, b_p)

    return out_padded[:B, :C]


if __name__ == "__main__":
    key = jax.random.PRNGKey(0)
    k_w, k_x = jax.random.split(key)

    bs = 64                                             # matches `bs = 64` in nn2.py
    in_features, out_features = 784, 10

    # Deterministic parameter init mirroring the PyTorch module:
    #   weights = randn(784, 10) / sqrt(784), bias = zeros(10)
    weights = (jax.random.normal(k_w, (in_features, out_features), jnp.float32)
               / math.sqrt(in_features))
    bias = jnp.zeros((out_features,), jnp.float32)

    # Synthetic MNIST-like batch: (bs, 784) float32
    xb = jax.random.uniform(k_x, (bs, in_features), jnp.float32)

    out = mnist_logistic_forward(xb, weights, bias)
    jax.block_until_ready(out)

    # Sanity check against plain JAX f32 reference (bf16 matmul operands with
    # f32 accumulation -> loose-ish but tight-enough tolerance).
    ref = xb @ weights + bias
    assert out.shape == (bs, out_features)
    assert out.dtype == jnp.float32
    assert jnp.allclose(out, ref, atol=1e-2, rtol=1e-2)

    print("KERNEL_OK")
</pallas_src>

<mosaic_0001>
module attributes {stable_mosaic.version = 11 : i64} {
  func.func @_logistic_kernel(%arg0: i32, %arg1: memref<64x784xbf16, #tpu.memory_space<vmem>>, %arg2: memref<784x128xbf16, #tpu.memory_space<vmem>>, %arg3: memref<1x128xf32, #tpu.memory_space<vmem>>, %arg4: memref<64x128xf32, #tpu.memory_space<vmem>>) attributes {dimension_semantics = [#tpu.dimension_semantics<parallel>], iteration_bounds = array<i64: 1>, scalar_prefetch = 0 : i64, scratch_operands = 0 : i64, tpu.core_type = #tpu.core_type<tc>, window_params = [{transform_indices = @transform_0, window_bounds = array<i64: 64, 784>}, {pipeline_mode = #tpu.pipeline_mode<synchronous>, transform_indices = @transform_1, window_bounds = array<i64: 784, 128>}, {pipeline_mode = #tpu.pipeline_mode<synchronous>, transform_indices = @transform_2, window_bounds = array<i64: 1, 128>}, {transform_indices = @transform_3, window_bounds = array<i64: 64, 128>}]} {
    %c0 = arith.constant 0 : index
    %c0_0 = arith.constant 0 : index
    %0 = vector.load %arg1[%c0, %c0_0] : memref<64x784xbf16, #tpu.memory_space<vmem>>, vector<64x784xbf16>
    %c0_1 = arith.constant 0 : index
    %c0_2 = arith.constant 0 : index
    %1 = vector.load %arg2[%c0_1, %c0_2] : memref<784x128xbf16, #tpu.memory_space<vmem>>, vector<784x128xbf16>
    %cst = arith.constant dense<0.000000e+00> : vector<64x128xf32>
    %2 = tpu.matmul %0, %1, %cst {dimension_numbers = #tpu.dot_dimension_numbers<[1], [0], [0], [1], [0, 0, 1, 1], [], []>} : vector<64x784xbf16>, vector<784x128xbf16>, vector<64x128xf32> -> vector<64x128xf32>
    %c0_3 = arith.constant 0 : index
    %c0_4 = arith.constant 0 : index
    %3 = vector.load %arg3[%c0_3, %c0_4] : memref<1x128xf32, #tpu.memory_space<vmem>>, vector<1x128xf32>
    %4 = vector.broadcast %3 : vector<1x128xf32> to vector<64x128xf32>
    %5 = arith.addf %2, %4 : vector<64x128xf32>
    %c0_5 = arith.constant 0 : index
    %c0_6 = arith.constant 0 : index
    %6 = vector.load %arg4[%c0_5, %c0_6] : memref<64x128xf32, #tpu.memory_space<vmem>>, vector<64x128xf32>
    tpu.vector_store %arg4[%c0_5, %c0_6], %5 {strides = array<i32>} : memref<64x128xf32, #tpu.memory_space<vmem>>, vector<64x128xf32>,
    return
  }
  func.func @transform_0(%arg0: i32) -> (i32, i32) {
    %c0_i32 = arith.constant 0 : i32
    %c0_i32_0 = arith.constant 0 : i32
    return %arg0, %c0_i32 : i32, i32
  }
  func.func @transform_1(%arg0: i32) -> (i32, i32) {
    %c0_i32 = arith.constant 0 : i32
    %c0_i32_0 = arith.constant 0 : i32
    %c0_i32_1 = arith.constant 0 : i32
    return %c0_i32, %c0_i32_0 : i32, i32
  }
  func.func @transform_2(%arg0: i32) -> (i32, i32) {
    %c0_i32 = arith.constant 0 : i32
    %c0_i32_0 = arith.constant 0 : i32
    %c0_i32_1 = arith.constant 0 : i32
    return %c0_i32, %c0_i32_0 : i32, i32
  }
  func.func @transform_3(%arg0: i32) -> (i32, i32) {
    %c0_i32 = arith.constant 0 : i32
    %c0_i32_0 = arith.constant 0 : i32
    return %arg0, %c0_i32 : i32, i32
  }
}

</mosaic_0001>

<llo_original>
// kernel: tpu_custom_call.1
$region0: #{tpu_custom_call.1}
  #allocation0 [shape = 'u32[]', space=smem, size = 0x4, offset = 0x4, fixed_abs, tag = 'smem constant byte address 0x4 - core index']
  #allocation1 [shape = 'u32[144,128]{1,0:T(1,128)}', space=vmem, size = 0x12000, scoped, tag = 'internal scratch']
  %s0 = inlined_call_operand.hbm [shape: bf16[64,784], index: 0, kind: input, shape index: {}]
  %s1 = inlined_call_operand.hbm [shape: bf16[784,128], index: 1, kind: input, shape index: {}]
  %s2 = inlined_call_operand.vmem [shape: f32[1,128], index: 2, kind: input, shape index: {}]
  %s3 = inlined_call_operand.hbm [shape: f32[64,128], index: 3, kind: output, shape index: {}]
  %s4 = sld [smem:[#allocation0]]
  $region30: #{tpu_custom_call.1} parent=0
    _
  %s6 = ssub.s32 1, %s4
  %s7 = scalar_select 0, %s6, %s4
  $region1: #{tpu_custom_call.1} parent=0
    #allocation2 [shape = 'u8[114688]{0}', space=vmem, size = 0x1c000, scoped, tag = 'input window, operand 0, single buffered']
    #allocation3 [shape = 's32[1]{0}', space=sflag, size = 0x4, scoped, tag = 'scoped memory for tpu_custom_call.1']
    #allocation4 [shape = 's32[1]{0}', space=sflag, size = 0x4, scoped, tag = 'scoped memory for tpu_custom_call.1']
    #allocation5 [shape = 'u8[200704]{0}', space=vmem, size = 0x31000, scoped, tag = 'input window, operand 1, single buffered']
    #allocation6 [shape = 's32[1]{0}', space=sflag, size = 0x4, scoped, tag = 'scoped memory for tpu_custom_call.1']
    #allocation7 [shape = 'u8[32768]{0}', space=vmem, size = 0x8000, scoped, tag = 'output window, operand 0, single buffered']
    %8 = vsyncpa [#allocation3], 0
    %9 = vsyncpa [#allocation6], 0
    %10 = vsyncpa [#allocation4], 0
    // Predicated region
    $region2: #{tpu_custom_call.1} parent=1 // pred_check
      _
    $region3: #{tpu_custom_call.1} parent=1 // pred_check_branch
      %12 = sbr.rel (0) target = $region5
    $region4: #{tpu_custom_call.1} parent=1 // pred_region
      %s14 = ssub.s32 3584, 3584
      %15 = vsyncadd [#allocation3], %s14
      %s16 = sshll.u32 [#allocation2], 4
      %s17 = int_to_ptr.vmem [resolvable:$true] %s16
      %22 = dma.hbm_to_vmem [thread:$0]  %s0, 3584, %s17, [#allocation3], 448, 448, 28
    $region5: #{tpu_custom_call.1} parent=1 // pred_fallthru
      _
    // Predicated region
    $region6: #{tpu_custom_call.1} parent=1 // pred_check
      _
    $region7: #{tpu_custom_call.1} parent=1 // pred_check_branch
      %24 = sbr.rel (0) target = $region9
    $region8: #{tpu_custom_call.1} parent=1 // pred_region
      %s26 = ssub.s32 6272, 6272
      %27 = vsyncadd [#allocation6], %s26
      %s28 = sshll.u32 [#allocation5], 4
      %s29 = int_to_ptr.vmem [resolvable:$true] %s28
      %34 = dma.hbm_to_vmem [thread:$0]  %s1, 6272, %s29, [#allocation6], 64, 64, 4
    $region9: #{tpu_custom_call.1} parent=1 // pred_fallthru
      _
    // Predicated region
    $region10: #{tpu_custom_call.1} parent=1 // pred_check
      _
    $region11: #{tpu_custom_call.1} parent=1 // pred_check_branch
      %36 = sbr.rel (0) target = $region13
    $region12: #{tpu_custom_call.1} parent=1 // pred_region
      _
    $region13: #{tpu_custom_call.1} parent=1 // pred_fallthru
      _
    // Predicated region
    $region14: #{tpu_custom_call.1} parent=1 // pred_check
      _
    $region15: #{tpu_custom_call.1} parent=1 // pred_check_branch
      %38 = sbr.rel (0) target = $region17
    $region16: #{tpu_custom_call.1} parent=1 // pred_region
      %39 = dma.done [#allocation3], 3584
    $region17: #{tpu_custom_call.1} parent=1 // pred_fallthru
      _
    // Predicated region
    $region18: #{tpu_custom_call.1} parent=1 // pred_check
      _
    $region19: #{tpu_custom_call.1} parent=1 // pred_check_branch
      %41 = sbr.rel (0) target = $region21
    $region20: #{tpu_custom_call.1} parent=1 // pred_region
      %42 = dma.done [#allocation6], 6272
    $region21: #{tpu_custom_call.1} parent=1 // pred_fallthru
      _
    %v44 = vld [vmem:[#allocation2] sm:$0xff]
    %v45 = vld [vmem:[#allocation2 + $0x8] sm:$0xff]
    %v46 = vld [vmem:[#allocation2 + $0x10] sm:$0xff]
    %v47 = vld [vmem:[#allocation2 + $0x18] sm:$0xf]
    %v48 = vld [vmem:[#allocation2 + $0x1c] sm:$0xff]
    %v49 = vld [vmem:[#allocation2 + $0x24] sm:$0xff]
    %v50 = vld [vmem:[#allocation2 + $0x2c] sm:$0xff]
    %v51 = vld [vmem:[#allocation2 + $0x34] sm:$0xf]
    %v52 = vld [vmem:[#allocation2 + $0x38] sm:$0xff]
    %v53 = vld [vmem:[#allocation2 + $0x40] sm:$0xff]
    %v54 = vld [vmem:[#allocation2 + $0x48] sm:$0xff]
    %v55 = vld [vmem:[#allocation2 + $0x50] sm:$0xf]
    %v56 = vld [vmem:[#allocation2 + $0x54] sm:$0xff]
    %v57 = vld [vmem:[#allocation2 + $0x5c] sm:$0xff]
    %v58 = vld [vmem:[#allocation2 + $0x64] sm:$0xff]
    %v59 = vld [vmem:[#allocation2 + $0x6c] sm:$0xf]
    %v60 = vld [vmem:[#allocation2 + $0x70] sm:$0xff]
    %v61 = vld [vmem:[#allocation2 + $0x78] sm:$0xff]
    %v62 = vld [vmem:[#allocation2 + $0x80] sm:$0xff]
    %v63 = vld [vmem:[#allocation2 + $0x88] sm:$0xf]
    %v64 = vld [vmem:[#allocation2 + $0x8c] sm:$0xff]
    %v65 = vld [vmem:[#allocation2 + $0x94] sm:$0xff]
    %v66 = vld [vmem:[#allocation2 + $0x9c] sm:$0xff]
    %v67 = vld [vmem:[#allocation2 + $0xa4] sm:$0xf]
    %v68 = vld [vmem:[#allocation2 + $0xa8] sm:$0xff]
    %v69 = vld [vmem:[#allocation2 + $0xb0] sm:$0xff]
    %v70 = vld [vmem:[#allocation2 + $0xb8] sm:$0xff]
    %v71 = vld [vmem:[#allocation2 + $0xc0] sm:$0xf]
    %v72 = vld [vmem:[#allocation2 + $0xc4] sm:$0xff]
    %v73 = vld [vmem:[#allocation2 + $0xcc] sm:$0xff]
    %v74 = vld [vmem:[#allocation2 + $0xd4] sm:$0xff]
    %v75 = vld [vmem:[#allocation2 + $0xdc] sm:$0xf]
    %v76 = vld [vmem:[#allocation5] sm:$0xf]
    %v77 = vld [vmem:[#allocation5 + $0x4] sm:$0xf]
    %v78 = vld [vmem:[#allocation5 + $0x8] sm:$0xf]
    %v79 = vld [vmem:[#allocation5 + $0xc] sm:$0xf]
    %v80 = vld [vmem:[#allocation5 + $0x10] sm:$0xf]
    %v81 = vld [vmem:[#allocation5 + $0x14] sm:$0xf]
    %v82 = vld [vmem:[#allocation5 + $0x18] sm:$0xf]
    %v83 = vld [vmem:[#allocation5 + $0x1c] sm:$0xf]
    %v84 = vld [vmem:[#allocation5 + $0x20] sm:$0xf]
    %v85 = vld [vmem:[#allocation5 + $0x24] sm:$0xf]
    %v86 = vld [vmem:[#allocation5 + $0x28] sm:$0xf]
    %v87 = vld [vmem:[#allocation5 + $0x2c] sm:$0xf]
    %v88 = vld [vmem:[#allocation5 + $0x30] sm:$0xf]
    %v89 = vld [vmem:[#allocation5 + $0x34] sm:$0xf]
    %v90 = vld [vmem:[#allocation5 + $0x38] sm:$0xf]
    %v91 = vld [vmem:[#allocation5 + $0x3c] sm:$0xf]
    %v92 = vld [vmem:[#allocation5 + $0x40] sm:$0xf]
    %v93 = vld [vmem:[#allocation5 + $0x44] sm:$0xf]
    %v94 = vld [vmem:[#allocation5 + $0x48] sm:$0xf]
    %v95 = vld [vmem:[#allocation5 + $0x4c] sm:$0xf]
    %v96 = vld [vmem:[#allocation5 + $0x50] sm:$0xf]
    %v97 = vld [vmem:[#allocation5 + $0x54] sm:$0xf]
    %v98 = vld [vmem:[#allocation5 + $0x58] sm:$0xf]
    %v99 = vld [vmem:[#allocation5 + $0x5c] sm:$0xf]
    %v100 = vld [vmem:[#allocation5 + $0x60] sm:$0xf]
    %v101 = vld [vmem:[#allocation5 + $0x64] sm:$0xf]
    %v102 = vld [vmem:[#allocation5 + $0x68] sm:$0xf]
    %v103 = vld [vmem:[#allocation5 + $0x6c] sm:$0xf]
    %v104 = vld [vmem:[#allocation5 + $0x70] sm:$0xf]
    %v105 = vld [vmem:[#allocation5 + $0x74] sm:$0xf]
    %v106 = vld [vmem:[#allocation5 + $0x78] sm:$0xf]
    %v107 = vld [vmem:[#allocation5 + $0x7c] sm:$0xf]
    %v108 = vld [vmem:[#allocation5 + $0x80] sm:$0xf]
    %v109 = vld [vmem:[#allocation5 + $0x84] sm:$0xf]
    %v110 = vld [vmem:[#allocation5 + $0x88] sm:$0xf]
    %v111 = vld [vmem:[#allocation5 + $0x8c] sm:$0xf]
    %v112 = vld [vmem:[#allocation5 + $0x90] sm:$0xf]
    %v113 = vld [vmem:[#allocation5 + $0x94] sm:$0xf]
    %v114 = vld [vmem:[#allocation5 + $0x98] sm:$0xf]
    %v115 = vld [vmem:[#allocation5 + $0x9c] sm:$0xf]
    %v116 = vld [vmem:[#allocation5 + $0xa0] sm:$0xf]
    %v117 = vld [vmem:[#allocation5 + $0xa4] sm:$0xf]
    %v118 = vld [vmem:[#allocation5 + $0xa8] sm:$0xf]
    %v119 = vld [vmem:[#allocation5 + $0xac] sm:$0xf]
    %v120 = vld [vmem:[#allocation5 + $0xb0] sm:$0xf]
    %v121 = vld [vmem:[#allocation5 + $0xb4] sm:$0xf]
    %v122 = vld [vmem:[#allocation5 + $0xb8] sm:$0xf]
    %v123 = vld [vmem:[#allocation5 + $0xbc] sm:$0xf]
    %v124 = vld [vmem:[#allocation5 + $0xc0] sm:$0xf]
    %v125 = vld [vmem:[#allocation5 + $0xc4] sm:$0xf]
    %v126 = vld [vmem:[#allocation5 + $0xc8] sm:$0xf]
    %v127 = vld [vmem:[#allocation5 + $0xcc] sm:$0xf]
    %v128 = vld [vmem:[#allocation5 + $0xd0] sm:$0xf]
    %v129 = vld [vmem:[#allocation5 + $0xd4] sm:$0xf]
    %v130 = vld [vmem:[#allocation5 + $0xd8] sm:$0xf]
    %v131 = vld [vmem:[#allocation5 + $0xdc] sm:$0xf]
    %v132 = vld [vmem:[#allocation5 + $0xe0] sm:$0xf]
    %v133 = vld [vmem:[#allocation5 + $0xe4] sm:$0xf]
    %v134 = vld [vmem:[#allocation5 + $0xe8] sm:$0xf]
    %v135 = vld [vmem:[#allocation5 + $0xec] sm:$0xf]
    %v136 = vld [vmem:[#allocation5 + $0xf0] sm:$0xf]
    %v137 = vld [vmem:[#allocation5 + $0xf4] sm:$0xf]
    %v138 = vld [vmem:[#allocation5 + $0xf8] sm:$0xf]
    %v139 = vld [vmem:[#allocation5 + $0xfc] sm:$0xf]
    %v140 = vld [vmem:[#allocation5 + $0x100] sm:$0xf]
    %v141 = vld [vmem:[#allocation5 + $0x104] sm:$0xf]
    %v142 = vld [vmem:[#allocation5 + $0x108] sm:$0xf]
    %v143 = vld [vmem:[#allocation5 + $0x10c] sm:$0xf]
    %v144 = vld [vmem:[#allocation5 + $0x110] sm:$0xf]
    %v145 = vld [vmem:[#allocation5 + $0x114] sm:$0xf]
    %v146 = vld [vmem:[#allocation5 + $0x118] sm:$0xf]
    %v147 = vld [vmem:[#allocation5 + $0x11c] sm:$0xf]
    %v148 = vld [vmem:[#allocation5 + $0x120] sm:$0xf]
    %v149 = vld [vmem:[#allocation5 + $0x124] sm:$0xf]
    %v150 = vld [vmem:[#allocation5 + $0x128] sm:$0xf]
    %v151 = vld [vmem:[#allocation5 + $0x12c] sm:$0xf]
    %v152 = vld [vmem:[#allocation5 + $0x130] sm:$0xf]
    %v153 = vld [vmem:[#allocation5 + $0x134] sm:$0xf]
    %v154 = vld [vmem:[#allocation5 + $0x138] sm:$0xf]
    %v155 = vld [vmem:[#allocation5 + $0x13c] sm:$0xf]
    %v156 = vld [vmem:[#allocation5 + $0x140] sm:$0xf]
    %v157 = vld [vmem:[#allocation5 + $0x144] sm:$0xf]
    %v158 = vld [vmem:[#allocation5 + $0x148] sm:$0xf]
    %v159 = vld [vmem:[#allocation5 + $0x14c] sm:$0xf]
    %v160 = vld [vmem:[#allocation5 + $0x150] sm:$0xf]
    %v161 = vld [vmem:[#allocation5 + $0x154] sm:$0xf]
    %v162 = vld [vmem:[#allocation5 + $0x158] sm:$0xf]
    %v163 = vld [vmem:[#allocation5 + $0x15c] sm:$0xf]
    %v164 = vld [vmem:[#allocation5 + $0x160] sm:$0xf]
    %v165 = vld [vmem:[#allocation5 + $0x164] sm:$0xf]
    %v166 = vld [vmem:[#allocation5 + $0x168] sm:$0xf]
    %v167 = vld [vmem:[#allocation5 + $0x16c] sm:$0xf]
    %v168 = vld [vmem:[#allocation5 + $0x170] sm:$0xf]
    %v169 = vld [vmem:[#allocation5 + $0x174] sm:$0xf]
    %v170 = vld [vmem:[#allocation5 + $0x178] sm:$0xf]
    %v171 = vld [vmem:[#allocation5 + $0x17c] sm:$0xf]
    %v172 = vld [vmem:[#allocation5 + $0x180] sm:$0xf]
    %v173 = vld [vmem:[#allocation5 + $0x184] sm:$0xf]
    %v174 = vld [vmem:[%s2] sm:$0x1]
    %v176 = vlaneseq
    %v177 = vshrl.u32 %v176, 7
    %v178 = vsub.s32 0, %v177
    %v179 = vrot.slane %v174, %v178
    %v213 = vunpack.c.l.b16 %v44
    %v214 = vunpack.c.h.b16 %v44
    %v215 = vunpack.c.l.b16 %v45
    %v216 = vunpack.c.h.b16 %v45
    %v217 = vunpack.c.l.b16 %v46
    %v218 = vunpack.c.h.b16 %v46
    %v219 = vunpack.c.l.b16 %v47
    %v220 = vunpack.c.l.b16 %v48
    %v221 = vunpack.c.h.b16 %v48
    %v222 = vunpack.c.l.b16 %v49
    %v223 = vunpack.c.h.b16 %v49
    %v224 = vunpack.c.l.b16 %v50
    %v225 = vunpack.c.h.b16 %v50
    %v226 = vunpack.c.l.b16 %v51
    %v227 = vunpack.c.l.b16 %v52
    %v228 = vunpack.c.h.b16 %v52
    %v229 = vunpack.c.l.b16 %v53
    %v230 = vunpack.c.h.b16 %v53
    %v231 = vunpack.c.l.b16 %v54
    %v232 = vunpack.c.h.b16 %v54
    %v233 = vunpack.c.l.b16 %v55
    %v234 = vunpack.c.l.b16 %v56
    %v235 = vunpack.c.h.b16 %v56
    %v236 = vunpack.c.l.b16 %v57
    %v237 = vunpack.c.h.b16 %v57
    %v238 = vunpack.c.l.b16 %v58
    %v239 = vunpack.c.h.b16 %v58
    %v240 = vunpack.c.l.b16 %v59
    %v241 = vunpack.c.l.b16 %v60
    %v242 = vunpack.c.h.b16 %v60
    %v243 = vunpack.c.l.b16 %v61
    %v244 = vunpack.c.h.b16 %v61
    %v245 = vunpack.c.l.b16 %v62
    %v246 = vunpack.c.h.b16 %v62
    %v247 = vunpack.c.l.b16 %v63
    %v248 = vunpack.c.l.b16 %v64
    %v249 = vunpack.c.h.b16 %v64
    %v250 = vunpack.c.l.b16 %v65
    %v251 = vunpack.c.h.b16 %v65
    %v252 = vunpack.c.l.b16 %v66
    %v253 = vunpack.c.h.b16 %v66
    %v254 = vunpack.c.l.b16 %v67
    %v255 = vunpack.c.l.b16 %v68
    %v256 = vunpack.c.h.b16 %v68
    %v257 = vunpack.c.l.b16 %v69
    %v258 = vunpack.c.h.b16 %v69
    %v259 = vunpack.c.l.b16 %v70
    %v260 = vunpack.c.h.b16 %v70
    %v261 = vunpack.c.l.b16 %v71
    %v262 = vunpack.c.l.b16 %v72
    %v263 = vunpack.c.h.b16 %v72
    %v264 = vunpack.c.l.b16 %v73
    %v265 = vunpack.c.h.b16 %v73
    %v266 = vunpack.c.l.b16 %v74
    %v267 = vunpack.c.h.b16 %v74
    %v268 = vunpack.c.l.b16 %v75
    %v269 = vpack.c.b16 %v220, %v213
    %v270 = vpack.c.b16 %v221, %v214
    %v271 = vpack.c.b16 %v222, %v215
    %v272 = vpack.c.b16 %v223, %v216
    %v273 = vpack.c.b16 %v224, %v217
    %v274 = vpack.c.b16 %v225, %v218
    %v275 = vpack.c.b16 %v226, %v219
    %v276 = vpack.c.b16 %v234, %v227
    %v277 = vpack.c.b16 %v235, %v228
    %v278 = vpack.c.b16 %v236, %v229
    %v279 = vpack.c.b16 %v237, %v230
    %v280 = vpack.c.b16 %v238, %v231
    %v281 = vpack.c.b16 %v239, %v232
    %v282 = vpack.c.b16 %v240, %v233
    %v283 = vpack.c.b16 %v248, %v241
    %v284 = vpack.c.b16 %v249, %v242
    %v285 = vpack.c.b16 %v250, %v243
    %v286 = vpack.c.b16 %v251, %v244
    %v287 = vpack.c.b16 %v252, %v245
    %v288 = vpack.c.b16 %v253, %v246
    %v289 = vpack.c.b16 %v254, %v247
    %v290 = vpack.c.b16 %v262, %v255
    %v291 = vpack.c.b16 %v263, %v256
    %v292 = vpack.c.b16 %v264, %v257
    %v293 = vpack.c.b16 %v265, %v258
    %v294 = vpack.c.b16 %v266, %v259
    %v295 = vpack.c.b16 %v267, %v260
    %v296 = vpack.c.b16 %v268, %v261
    %v419 = vunpack.c.l.b16 %v76
    %v420 = vunpack.c.l.b16 %v77
    %v421 = vunpack.c.l.b16 %v78
    %v422 = vunpack.c.l.b16 %v79
    %v423 = vunpack.c.l.b16 %v80
    %v424 = vunpack.c.l.b16 %v81
    %v425 = vunpack.c.l.b16 %v82
    %v426 = vunpack.c.l.b16 %v83
    %v427 = vunpack.c.l.b16 %v84
    %v428 = vunpack.c.l.b16 %v85
    %v429 = vunpack.c.l.b16 %v86
    %v430 = vunpack.c.l.b16 %v87
    %v431 = vunpack.c.l.b16 %v88
    %v432 = vunpack.c.l.b16 %v89
    %v433 = vunpack.c.l.b16 %v90
    %v434 = vunpack.c.l.b16 %v91
    %v435 = vunpack.c.l.b16 %v92
    %v436 = vunpack.c.l.b16 %v93
    %v437 = vunpack.c.l.b16 %v94
    %v438 = vunpack.c.l.b16 %v95
    %v439 = vunpack.c.l.b16 %v96
    %v440 = vunpack.c.l.b16 %v97
    %v441 = vunpack.c.l.b16 %v98
    %v442 = vunpack.c.l.b16 %v99
    %v443 = vunpack.c.l.b16 %v100
    %v444 = vunpack.c.l.b16 %v101
    %v445 = vunpack.c.l.b16 %v102
    %v446 = vunpack.c.l.b16 %v103
    %v447 = vunpack.c.l.b16 %v104
    %v448 = vunpack.c.l.b16 %v105
    %v449 = vunpack.c.l.b16 %v106
    %v450 = vunpack.c.l.b16 %v107
    %v451 = vunpack.c.l.b16 %v108
    %v452 = vunpack.c.l.b16 %v109
    %v453 = vunpack.c.l.b16 %v110
    %v454 = vunpack.c.l.b16 %v111
    %v455 = vunpack.c.l.b16 %v112
    %v456 = vunpack.c.l.b16 %v113
    %v457 = vunpack.c.l.b16 %v114
    %v458 = vunpack.c.l.b16 %v115
    %v459 = vunpack.c.l.b16 %v116
    %v460 = vunpack.c.l.b16 %v117
    %v461 = vunpack.c.l.b16 %v118
    %v462 = vunpack.c.l.b16 %v119
    %v463 = vunpack.c.l.b16 %v120
    %v464 = vunpack.c.l.b16 %v121
    %v465 = vunpack.c.l.b16 %v122
    %v466 = vunpack.c.l.b16 %v123
    %v467 = vunpack.c.l.b16 %v124
    %v468 = vunpack.c.l.b16 %v125
    %v469 = vunpack.c.l.b16 %v126
    %v470 = vunpack.c.l.b16 %v127
    %v471 = vunpack.c.l.b16 %v128
    %v472 = vunpack.c.l.b16 %v129
    %v473 = vunpack.c.l.b16 %v130
    %v474 = vunpack.c.l.b16 %v131
    %v475 = vunpack.c.l.b16 %v132
    %v476 = vunpack.c.l.b16 %v133
    %v477 = vunpack.c.l.b16 %v134
    %v478 = vunpack.c.l.b16 %v135
    %v479 = vunpack.c.l.b16 %v136
    %v480 = vunpack.c.l.b16 %v137
    %v481 = vunpack.c.l.b16 %v138
    %v482 = vunpack.c.l.b16 %v139
    %v483 = vunpack.c.l.b16 %v140
    %v484 = vunpack.c.l.b16 %v141
    %v485 = vunpack.c.l.b16 %v142
    %v486 = vunpack.c.l.b16 %v143
    %v487 = vunpack.c.l.b16 %v144
    %v488 = vunpack.c.l.b16 %v145
    %v489 = vunpack.c.l.b16 %v146
    %v490 = vunpack.c.l.b16 %v147
    %v491 = vunpack.c.l.b16 %v148
    %v492 = vunpack.c.l.b16 %v149
    %v493 = vunpack.c.l.b16 %v150
    %v494 = vunpack.c.l.b16 %v151
    %v495 = vunpack.c.l.b16 %v152
    %v496 = vunpack.c.l.b16 %v153
    %v497 = vunpack.c.l.b16 %v154
    %v498 = vunpack.c.l.b16 %v155
    %v499 = vunpack.c.l.b16 %v156
    %v500 = vunpack.c.l.b16 %v157
    %v501 = vunpack.c.l.b16 %v158
    %v502 = vunpack.c.l.b16 %v159
    %v503 = vunpack.c.l.b16 %v160
    %v504 = vunpack.c.l.b16 %v161
    %v505 = vunpack.c.l.b16 %v162
    %v506 = vunpack.c.l.b16 %v163
    %v507 = vunpack.c.l.b16 %v164
    %v508 = vunpack.c.l.b16 %v165
    %v509 = vunpack.c.l.b16 %v166
    %v510 = vunpack.c.l.b16 %v167
    %v511 = vunpack.c.l.b16 %v168
    %v512 = vunpack.c.l.b16 %v169
    %v513 = vunpack.c.l.b16 %v170
    %v514 = vunpack.c.l.b16 %v171
    %v515 = vunpack.c.l.b16 %v172
    %v516 = vunpack.c.l.b16 %v173
    %v517 = vpack.c.b16 %v420, %v419
    %v518 = vpack.c.b16 %v422, %v421
    %v519 = vpack.c.b16 %v424, %v423
    %v520 = vpack.c.b16 %v426, %v425
    %v521 = vpack.c.b16 %v428, %v427
    %v522 = vpack.c.b16 %v430, %v429
    %v523 = vpack.c.b16 %v432, %v431
    %v524 = vpack.c.b16 %v434, %v433
    %v525 = vpack.c.b16 %v436, %v435
    %v526 = vpack.c.b16 %v438, %v437
    %v527 = vpack.c.b16 %v440, %v439
    %v528 = vpack.c.b16 %v442, %v441
    %v529 = vpack.c.b16 %v444, %v443
    %v530 = vpack.c.b16 %v446, %v445
    %v531 = vpack.c.b16 %v448, %v447
    %v532 = vpack.c.b16 %v450, %v449
    %v533 = vpack.c.b16 %v452, %v451
    %v534 = vpack.c.b16 %v454, %v453
    %v535 = vpack.c.b16 %v456, %v455
    %v536 = vpack.c.b16 %v458, %v457
    %v537 = vpack.c.b16 %v460, %v459
    %v538 = vpack.c.b16 %v462, %v461
    %v539 = vpack.c.b16 %v464, %v463
    %v540 = vpack.c.b16 %v466, %v465
    %v541 = vpack.c.b16 %v468, %v467
    %v542 = vpack.c.b16 %v470, %v469
    %v543 = vpack.c.b16 %v472, %v471
    %v544 = vpack.c.b16 %v474, %v473
    %v545 = vpack.c.b16 %v476, %v475
    %v546 = vpack.c.b16 %v478, %v477
    %v547 = vpack.c.b16 %v480, %v479
    %v548 = vpack.c.b16 %v482, %v481
    %v549 = vpack.c.b16 %v484, %v483
    %v550 = vpack.c.b16 %v486, %v485
    %v551 = vpack.c.b16 %v488, %v487
    %v552 = vpack.c.b16 %v490, %v489
    %v553 = vpack.c.b16 %v492, %v491
    %v554 = vpack.c.b16 %v494, %v493
    %v555 = vpack.c.b16 %v496, %v495
    %v556 = vpack.c.b16 %v498, %v497
    %v557 = vpack.c.b16 %v500, %v499
    %v558 = vpack.c.b16 %v502, %v501
    %v559 = vpack.c.b16 %v504, %v503
    %v560 = vpack.c.b16 %v506, %v505
    %v561 = vpack.c.b16 %v508, %v507
    %v562 = vpack.c.b16 %v510, %v509
    %v563 = vpack.c.b16 %v512, %v511
    %v564 = vpack.c.b16 %v514, %v513
    %v565 = vpack.c.b16 %v516, %v515
    %vm615 = vcmask 130048
    %v617 = vsel %vm615, %v275, 0
    %v620 = vsel %vm615, %v282, 0
    %v623 = vsel %vm615, %v289, 0
    %v626 = vsel %vm615, %v296, 0
    %628 = vmatprep.subr.bf16.mxu0 0
    %629 = vmatpush1.bf16.msra.mxu0 %v524
    %630 = vmatprep.subr.bf16.mxu0 0
    %631 = vmatpush1.bf16.msra.mxu0 %v523
    %632 = vmatprep.subr.bf16.mxu0 0
    %633 = vmatpush1.bf16.msra.mxu0 %v522
    %634 = vmatprep.subr.bf16.mxu0 0
    %635 = vmatpush1.bf16.msra.mxu0 %v521
    %636 = vmatprep.subr.bf16.mxu0 0
    %637 = vmatpush1.bf16.msra.mxu0 %v520
    %638 = vmatprep.subr.bf16.mxu0 0
    %639 = vmatpush1.bf16.msra.mxu0 %v519
    %640 = vmatprep.subr.bf16.mxu0 0
    %641 = vmatpush1.bf16.msra.mxu0 %v518
    %642 = vmatprep.subr.bf16.mxu0 0
    %643 = vmatpush1.bf16.msra.mxu0 %v517
    %644 = vmatprep.subr.bf16.mxu0 0
    %645 = vmatpush2.bf16.msra.mxu0 %v532
    %646 = vmatprep.subr.bf16.mxu0 0
    %647 = vmatpush2.bf16.msra.mxu0 %v531
    %648 = vmatprep.subr.bf16.mxu0 0
    %649 = vmatpush2.bf16.msra.mxu0 %v530
    %650 = vmatprep.subr.bf16.mxu0 0
    %651 = vmatpush2.bf16.msra.mxu0 %v529
    %652 = vmatprep.subr.bf16.mxu0 0
    %653 = vmatpush2.bf16.msra.mxu0 %v528
    %654 = vmatprep.subr.bf16.mxu0 0
    %655 = vmatpush2.bf16.msra.mxu0 %v527
    %656 = vmatprep.subr.bf16.mxu0 0
    %657 = vmatpush2.bf16.msra.mxu0 %v526
    %658 = vmatprep.subr.bf16.mxu0 0
    %659 = vmatpush2.bf16.msra.mxu0 %v525
    %660 = vmatprep.mubr.bf16.mxu0 %v270
    %661 = vmatmul.mubr.bf16.gmra.mxu0 %v269
    %v662 = vpop.f32.mrf.mxu0
    %v663 = vadd.f32 %v179, %v662
    %v664 = vpop.f32.mrf.mxu0
    %v665 = vpop.f32.mrf.mxu0
    %v666 = vadd.f32 %v179, %v665
    %v667 = vpop.f32.mrf.mxu0
    %668 = vmatprep.mubr.bf16.mxu0 %v277
    %669 = vmatmul.mubr.bf16.gmra.mxu0 %v276
    %v670 = vpop.f32.mrf.mxu0
    %v671 = vadd.f32 %v179, %v670
    %v672 = vpop.f32.mrf.mxu0
    %v673 = vpop.f32.mrf.mxu0
    %v674 = vadd.f32 %v179, %v673
    %v675 = vpop.f32.mrf.mxu0
    %676 = vmatprep.mubr.bf16.mxu0 %v284
    %677 = vmatmul.mubr.bf16.gmra.mxu0 %v283
    %v678 = vpop.f32.mrf.mxu0
    %v679 = vadd.f32 %v179, %v678
    %v680 = vpop.f32.mrf.mxu0
    %v681 = vpop.f32.mrf.mxu0
    %v682 = vadd.f32 %v179, %v681
    %v683 = vpop.f32.mrf.mxu0
    %684 = vmatprep.mubr.bf16.mxu0 %v291
    %685 = vmatmul.mubr.bf16.gmra.mxu0 %v290
    %v686 = vpop.f32.mrf.mxu0
    %v687 = vadd.f32 %v179, %v686
    %v688 = vpop.f32.mrf.mxu0
    %v689 = vpop.f32.mrf.mxu0
    %v690 = vadd.f32 %v179, %v689
    %v691 = vpop.f32.mrf.mxu0
    %692 = vdwg.mxu0
    %693 = vmatprep.subr.bf16.mxu0 0
    %694 = vmatpush1.bf16.msra.mxu0 %v540
    %695 = vmatprep.subr.bf16.mxu0 0
    %696 = vmatpush1.bf16.msra.mxu0 %v539
    %697 = vmatprep.subr.bf16.mxu0 0
    %698 = vmatpush1.bf16.msra.mxu0 %v538
    %699 = vmatprep.subr.bf16.mxu0 0
    %700 = vmatpush1.bf16.msra.mxu0 %v537
    %701 = vmatprep.subr.bf16.mxu0 0
    %702 = vmatpush1.bf16.msra.mxu0 %v536
    %703 = vmatprep.subr.bf16.mxu0 0
    %704 = vmatpush1.bf16.msra.mxu0 %v535
    %705 = vmatprep.subr.bf16.mxu0 0
    %706 = vmatpush1.bf16.msra.mxu0 %v534
    %707 = vmatprep.subr.bf16.mxu0 0
    %708 = vmatpush1.bf16.msra.mxu0 %v533
    %709 = vmatprep.subr.bf16.mxu0 0
    %710 = vmatpush2.bf16.msra.mxu0 %v548
    %711 = vmatprep.subr.bf16.mxu0 0
    %712 = vmatpush2.bf16.msra.mxu0 %v547
    %713 = vmatprep.subr.bf16.mxu0 0
    %714 = vmatpush2.bf16.msra.mxu0 %v546
    %715 = vmatprep.subr.bf16.mxu0 0
    %716 = vmatpush2.bf16.msra.mxu0 %v545
    %717 = vmatprep.subr.bf16.mxu0 0
    %718 = vmatpush2.bf16.msra.mxu0 %v544
    %719 = vmatprep.subr.bf16.mxu0 0
    %720 = vmatpush2.bf16.msra.mxu0 %v543
    %721 = vmatprep.subr.bf16.mxu0 0
    %722 = vmatpush2.bf16.msra.mxu0 %v542
    %723 = vmatprep.subr.bf16.mxu0 0
    %724 = vmatpush2.bf16.msra.mxu0 %v541
    %725 = vmatprep.mubr.bf16.mxu0 %v272
    %726 = vmatmul.mubr.bf16.gmra.mxu0 %v271
    %v727 = vpop.f32.mrf.mxu0
    %v728 = vadd.f32 %v663, %v727
    %v729 = vpop.f32.mrf.mxu0
    %v730 = vpop.f32.mrf.mxu0
    %v731 = vadd.f32 %v666, %v730
    %v732 = vpop.f32.mrf.mxu0
    %733 = vmatprep.mubr.bf16.mxu0 %v279
    %734 = vmatmul.mubr.bf16.gmra.mxu0 %v278
    %v735 = vpop.f32.mrf.mxu0
    %v736 = vadd.f32 %v671, %v735
    %v737 = vpop.f32.mrf.mxu0
    %v738 = vpop.f32.mrf.mxu0
    %v739 = vadd.f32 %v674, %v738
    %v740 = vpop.f32.mrf.mxu0
    %741 = vmatprep.mubr.bf16.mxu0 %v286
    %742 = vmatmul.mubr.bf16.gmra.mxu0 %v285
    %v743 = vpop.f32.mrf.mxu0
    %v744 = vadd.f32 %v679, %v743
    %v745 = vpop.f32.mrf.mxu0
    %v746 = vpop.f32.mrf.mxu0
    %v747 = vadd.f32 %v682, %v746
    %v748 = vpop.f32.mrf.mxu0
    %749 = vmatprep.mubr.bf16.mxu0 %v293
    %750 = vmatmul.mubr.bf16.gmra.mxu0 %v292
    %v751 = vpop.f32.mrf.mxu0
    %v752 = vadd.f32 %v687, %v751
    %v753 = vpop.f32.mrf.mxu0
    %v754 = vpop.f32.mrf.mxu0
    %v755 = vadd.f32 %v690, %v754
    %v756 = vpop.f32.mrf.mxu0
    %757 = vdwg.mxu0
    %758 = vmatprep.subr.bf16.mxu0 0
    %759 = vmatpush1.bf16.msra.mxu0 %v556
    %760 = vmatprep.subr.bf16.mxu0 0
    %761 = vmatpush1.bf16.msra.mxu0 %v555
    %762 = vmatprep.subr.bf16.mxu0 0
    %763 = vmatpush1.bf16.msra.mxu0 %v554
    %764 = vmatprep.subr.bf16.mxu0 0
    %765 = vmatpush1.bf16.msra.mxu0 %v553
    %766 = vmatprep.subr.bf16.mxu0 0
    %767 = vmatpush1.bf16.msra.mxu0 %v552
    %768 = vmatprep.subr.bf16.mxu0 0
    %769 = vmatpush1.bf16.msra.mxu0 %v551
    %770 = vmatprep.subr.bf16.mxu0 0
    %771 = vmatpush1.bf16.msra.mxu0 %v550
    %772 = vmatprep.subr.bf16.mxu0 0
    %773 = vmatpush1.bf16.msra.mxu0 %v549
    %774 = vmatprep.subr.bf16.mxu0 0
    %775 = vmatpush2.bf16.msra.mxu0 %v564
    %776 = vmatprep.subr.bf16.mxu0 0
    %777 = vmatpush2.bf16.msra.mxu0 %v563
    %778 = vmatprep.subr.bf16.mxu0 0
    %779 = vmatpush2.bf16.msra.mxu0 %v562
    %780 = vmatprep.subr.bf16.mxu0 0
    %781 = vmatpush2.bf16.msra.mxu0 %v561
    %782 = vmatprep.subr.bf16.mxu0 0
    %783 = vmatpush2.bf16.msra.mxu0 %v560
    %784 = vmatprep.subr.bf16.mxu0 0
    %785 = vmatpush2.bf16.msra.mxu0 %v559
    %786 = vmatprep.subr.bf16.mxu0 0
    %787 = vmatpush2.bf16.msra.mxu0 %v558
    %788 = vmatprep.subr.bf16.mxu0 0
    %789 = vmatpush2.bf16.msra.mxu0 %v557
    %790 = vmatprep.mubr.bf16.mxu0 %v274
    %791 = vmatmul.mubr.bf16.gmra.mxu0 %v273
    %v792 = vpop.f32.mrf.mxu0
    %v793 = vadd.f32 %v728, %v792
    %v794 = vpop.f32.mrf.mxu0
    %v795 = vpop.f32.mrf.mxu0
    %v796 = vadd.f32 %v731, %v795
    %v797 = vpop.f32.mrf.mxu0
    %798 = vmatprep.mubr.bf16.mxu0 %v281
    %799 = vmatmul.mubr.bf16.gmra.mxu0 %v280
    %v800 = vpop.f32.mrf.mxu0
    %v801 = vadd.f32 %v736, %v800
    %v802 = vpop.f32.mrf.mxu0
    %v803 = vpop.f32.mrf.mxu0
    %v804 = vadd.f32 %v739, %v803
    %v805 = vpop.f32.mrf.mxu0
    %806 = vmatprep.mubr.bf16.mxu0 %v288
    %807 = vmatmul.mubr.bf16.gmra.mxu0 %v287
    %v808 = vpop.f32.mrf.mxu0
    %v809 = vadd.f32 %v744, %v808
    %v810 = vpop.f32.mrf.mxu0
    %v811 = vpop.f32.mrf.mxu0
    %v812 = vadd.f32 %v747, %v811
    %v813 = vpop.f32.mrf.mxu0
    %814 = vmatprep.mubr.bf16.mxu0 %v295
    %815 = vmatmul.mubr.bf16.gmra.mxu0 %v294
    %v816 = vpop.f32.mrf.mxu0
    %v817 = vadd.f32 %v752, %v816
    %v818 = vpop.f32.mrf.mxu0
    %v819 = vpop.f32.mrf.mxu0
    %v820 = vadd.f32 %v755, %v819
    %v821 = vpop.f32.mrf.mxu0
    %822 = vdwg.mxu0
    %823 = vmatprep.subr.bf16.mxu0 0
    %824 = vmatpush1.bf16.msra.mxu0 0
    %825 = vmatprep.subr.bf16.mxu0 0
    %826 = vmatpush1.bf16.msra.mxu0 0
    %827 = vmatprep.subr.bf16.mxu0 0
    %828 = vmatpush1.bf16.msra.mxu0 0
    %829 = vmatprep.subr.bf16.mxu0 0
    %830 = vmatpush1.bf16.msra.mxu0 0
    %831 = vmatprep.subr.bf16.mxu0 0
    %832 = vmatpush1.bf16.msra.mxu0 0
    %833 = vmatprep.subr.bf16.mxu0 0
    %834 = vmatpush1.bf16.msra.mxu0 0
    %835 = vmatprep.subr.bf16.mxu0 0
    %836 = vmatpush1.bf16.msra.mxu0 0
    %837 = vmatprep.subr.bf16.mxu0 0
    %838 = vmatpush1.bf16.msra.mxu0 %v565
    %839 = vmatprep.subr.bf16.mxu0 0
    %840 = vmatpush2.bf16.msra.mxu0 0
    %841 = vmatprep.subr.bf16.mxu0 0
    %842 = vmatpush2.bf16.msra.mxu0 0
    %843 = vmatprep.subr.bf16.mxu0 0
    %844 = vmatpush2.bf16.msra.mxu0 0
    %845 = vmatprep.subr.bf16.mxu0 0
    %846 = vmatpush2.bf16.msra.mxu0 0
    %847 = vmatprep.subr.bf16.mxu0 0
    %848 = vmatpush2.bf16.msra.mxu0 0
    %849 = vmatprep.subr.bf16.mxu0 0
    %850 = vmatpush2.bf16.msra.mxu0 0
    %851 = vmatprep.subr.bf16.mxu0 0
    %852 = vmatpush2.bf16.msra.mxu0 0
    %853 = vmatprep.subr.bf16.mxu0 0
    %854 = vmatpush2.bf16.msra.mxu0 0
    %855 = vmatprep.mubr.bf16.mxu0 0
    %856 = vmatmul.mubr.bf16.gmra.mxu0 %v617
    %v857 = vpop.f32.mrf.mxu0
    %v858 = vadd.f32 %v793, %v857
    %v859 = vpop.f32.mrf.mxu0
    %v860 = vpop.f32.mrf.mxu0
    %v861 = vadd.f32 %v796, %v860
    %v862 = vpop.f32.mrf.mxu0
    %863 = vmatprep.mubr.bf16.mxu0 0
    %864 = vmatmul.mubr.bf16.gmra.mxu0 %v620
    %v865 = vpop.f32.mrf.mxu0
    %v866 = vadd.f32 %v801, %v865
    %v867 = vpop.f32.mrf.mxu0
    %v868 = vpop.f32.mrf.mxu0
    %v869 = vadd.f32 %v804, %v868
    %v870 = vpop.f32.mrf.mxu0
    %871 = vmatprep.mubr.bf16.mxu0 0
    %872 = vmatmul.mubr.bf16.gmra.mxu0 %v623
    %v873 = vpop.f32.mrf.mxu0
    %v874 = vadd.f32 %v809, %v873
    %v875 = vpop.f32.mrf.mxu0
    %v876 = vpop.f32.mrf.mxu0
    %v877 = vadd.f32 %v812, %v876
    %v878 = vpop.f32.mrf.mxu0
    %879 = vmatprep.mubr.bf16.mxu0 0
    %880 = vmatmul.mubr.bf16.gmra.mxu0 %v626
    %v881 = vpop.f32.mrf.mxu0
    %v882 = vadd.f32 %v817, %v881
    %v883 = vpop.f32.mrf.mxu0
    %v884 = vpop.f32.mrf.mxu0
    %v885 = vadd.f32 %v820, %v884
    %v886 = vpop.f32.mrf.mxu0
    %887 = vdwg.mxu0
    %888 = vst [vmem:[#allocation7] sm:$0xff] %v858
    %889 = vst [vmem:[#allocation7 + $0x8] sm:$0xff] %v861
    %890 = vst [vmem:[#allocation7 + $0x10] sm:$0xff] %v866
    %891 = vst [vmem:[#allocation7 + $0x18] sm:$0xff] %v869
    %892 = vst [vmem:[#allocation7 + $0x20] sm:$0xff] %v874
    %893 = vst [vmem:[#allocation7 + $0x28] sm:$0xff] %v877
    %894 = vst [vmem:[#allocation7 + $0x30] sm:$0xff] %v882
    %895 = vst [vmem:[#allocation7 + $0x38] sm:$0xff] %v885
    // Predicated region
    $region22: #{tpu_custom_call.1} parent=1 // pred_check
      _
    $region23: #{tpu_custom_call.1} parent=1 // pred_check_branch
      %897 = sbr.rel (0) target = $region25
    $region24: #{tpu_custom_call.1} parent=1 // pred_region
      %s899 = ssub.s32 1024, 1024
      %900 = vsyncadd [#allocation4], %s899
      %s901 = sshll.u32 [#allocation7], 4
      %s902 = int_to_ptr.vmem [resolvable:$true] %s901
      %907 = dma.vmem_to_hbm [thread:$0]  %s902, 1024, %s3, [#allocation4], 128, 128, 8
    $region25: #{tpu_custom_call.1} parent=1 // pred_fallthru
      _
    // Predicated region
    $region26: #{tpu_custom_call.1} parent=1 // pred_check
      _
    $region27: #{tpu_custom_call.1} parent=1 // pred_check_branch
      %909 = sbr.rel (0) target = $region29
    $region28: #{tpu_custom_call.1} parent=1 // pred_region
      %910 = dma.done [#allocation4], 1024
    $region29: #{tpu_custom_call.1} parent=1 // pred_fallthru
      _
    %911 = vsyncpa [#allocation3], 1
    %912 = vsyncpa [#allocation6], 1
    %913 = vsyncpa [#allocation4], 1

</llo_original>
